<compile_context>
chip_gen: v7x
topology: tpu7x:2x2x1
jax: 0.10.0
libtpu: 0.0.40
codegen_flags: <defaults>
</compile_context>

<pallas_src>
import jax
import jax.numpy as jnp
from jax.experimental import pallas as pl
from jax.experimental.pallas import tpu as pltpu


def _critic_kernel(s_ref, a_ref,
                   w1s_ref, w1a_ref, b1_ref,
                   w2_ref, b2_ref,
                   w3_ref, b3_ref,
                   w4_ref, b4_ref,
                   out_ref):
    """Fused 4-layer MLP on one batch tile.

    h1 = relu(s @ W1s + a @ W1a + b1)
    h2 = relu(h1 @ W2 + b2)
    h3 = relu(h2 @ W3 + b3)
    q  = h3 @ W4 + b4          (lane-dense 128-wide slab; column 0 is real)
    """
    h = jnp.dot(s_ref[...], w1s_ref[...], preferred_element_type=jnp.float32)
    h = h + jnp.dot(a_ref[...], w1a_ref[...], preferred_element_type=jnp.float32)
    h = jnp.maximum(h + b1_ref[...], 0.0)                      # (TB, Hp)

    h = jnp.dot(h, w2_ref[...], preferred_element_type=jnp.float32)
    h = jnp.maximum(h + b2_ref[...], 0.0)                      # (TB, Hp)

    h = jnp.dot(h, w3_ref[...], preferred_element_type=jnp.float32)
    h = jnp.maximum(h + b3_ref[...], 0.0)                      # (TB, Hp)

    q = jnp.dot(h, w4_ref[...], preferred_element_type=jnp.float32)
    out_ref[...] = q + b4_ref[...]                             # (TB, 128)


def _round_up(n, m):
    return (n + m - 1) // m * m


def _pad2d(x, rows, cols):
    return jnp.zeros((rows, cols), x.dtype).at[: x.shape[0], : x.shape[1]].set(x)


class CriticPallas:
    """JAX/Pallas port of the SAC Critic module (float32 on TPU)."""

    LANE = 128      # lane width (last dim tile)
    SUB = 8         # sublane width (batch tile granularity)
    MAX_TB = 256    # batch tile size for large batches

    def __init__(self, s_dim, a_dim, hidden_dim, key):
        self.s_dim = s_dim
        self.a_dim = a_dim
        self.hidden_dim = hidden_dim

        # --- init with REAL fan_in (not padded), matching nn.Linear ---------
        dims = [s_dim + a_dim, hidden_dim, hidden_dim, hidden_dim, 1]
        keys = jax.random.split(key, 2 * (len(dims) - 1))
        self.params = []          # unpadded, stored as [in, out]
        for i in range(len(dims) - 1):
            fan_in, fan_out = dims[i], dims[i + 1]
            bound = 1.0 / float(jnp.sqrt(jnp.float32(fan_in)))
            w = jax.random.uniform(keys[2 * i], (fan_in, fan_out),
                                   jnp.float32, -bound, bound)
            b = jax.random.uniform(keys[2 * i + 1], (fan_out,),
                                   jnp.float32, -bound, bound)
            self.params.append((w, b))

        # --- pre-pad parameters ONCE to TPU tiles ----------------------------
        L = self.LANE
        self.Sp = _round_up(max(s_dim, L), L)
        self.Ap = _round_up(max(a_dim, L), L)
        self.Hp = _round_up(max(hidden_dim, L), L)
        self.Op = L                                   # padded out dim (real = 1)

        (w1, b1), (w2, b2), (w3, b3), (w4, b4) = self.params
        w1s, w1a = w1[:s_dim, :], w1[s_dim:, :]        # split concat away
        self.w1s_p = _pad2d(w1s, self.Sp, self.Hp)
        self.w1a_p = _pad2d(w1a, self.Ap, self.Hp)
        self.b1_p = _pad2d(b1[None, :], 1, self.Hp)
        self.w2_p = _pad2d(w2, self.Hp, self.Hp)
        self.b2_p = _pad2d(b2[None, :], 1, self.Hp)
        self.w3_p = _pad2d(w3, self.Hp, self.Hp)
        self.b3_p = _pad2d(b3[None, :], 1, self.Hp)
        self.w4_p = _pad2d(w4, self.Hp, self.Op)
        self.b4_p = _pad2d(b4[None, :], 1, self.Op)

    def __call__(self, s, a):
        s = s.reshape(-1, self.s_dim).astype(jnp.float32)
        a = a.reshape(-1, self.a_dim).astype(jnp.float32)
        B = s.shape[0]
        Sp, Ap, Hp, Op = self.Sp, self.Ap, self.Hp, self.Op

        # Pick a batch tile: small batches -> one tile; large batches -> 256-row
        # tiles streamed through the pipeline.
        TB = min(self.MAX_TB, _round_up(max(B, self.SUB), self.SUB))
        Bp = _round_up(B, TB)
        n_tiles = Bp // TB

        # Only the activations (which change every call) are padded here.
        s_p = jnp.zeros((Bp, Sp), jnp.float32).at[:B, : self.s_dim].set(s)
        a_p = jnp.zeros((Bp, Ap), jnp.float32).at[:B, : self.a_dim].set(a)

        # Batch-tiled activations; weights/biases resident in VMEM across tiles.
        act_spec = lambda cols: pl.BlockSpec((TB, cols), lambda i: (i, 0))
        res_spec = lambda r, c: pl.BlockSpec((r, c), lambda i: (0, 0))

        H, D = self.hidden_dim, self.s_dim + self.a_dim
        flops = 2 * B * (D * H + 2 * H * H + H)
        bytes_accessed = 4 * (B * (Sp + Ap + Op)
                              + Sp * Hp + Ap * Hp + 2 * Hp * Hp + Hp * Op
                              + 3 * Hp + Op)

        out_p = pl.pallas_call(
            _critic_kernel,
            out_shape=jax.ShapeDtypeStruct((Bp, Op), jnp.float32),
            grid=(n_tiles,),
            in_specs=[
                act_spec(Sp),                 # s tile
                act_spec(Ap),                 # a tile
                res_spec(Sp, Hp), res_spec(Ap, Hp), res_spec(1, Hp),   # layer 1
                res_spec(Hp, Hp), res_spec(1, Hp),                     # layer 2
                res_spec(Hp, Hp), res_spec(1, Hp),                     # layer 3
                res_spec(Hp, Op), res_spec(1, Op),                     # layer 4
            ],
            out_specs=act_spec(Op),
            compiler_params=pltpu.CompilerParams(
                dimension_semantics=("parallel",)),
            cost_estimate=pl.CostEstimate(
                flops=int(flops), transcendentals=0,
                bytes_accessed=int(bytes_accessed)),
        )(s_p, a_p,
          self.w1s_p, self.w1a_p, self.b1_p,
          self.w2_p, self.b2_p,
          self.w3_p, self.b3_p,
          self.w4_p, self.b4_p)

        return out_p[:B, :1]                                   # (B, 1)

    # Pure-JAX reference for correctness checking.
    def reference(self, s, a):
        s = s.reshape(-1, self.s_dim).astype(jnp.float32)
        a = a.reshape(-1, self.a_dim).astype(jnp.float32)
        x = jnp.concatenate([s, a], axis=1)
        for i, (w, b) in enumerate(self.params):
            x = x @ w + b
            if i < len(self.params) - 1:
                x = jnp.maximum(x, 0.0)
        return x


if __name__ == "__main__":
    key = jax.random.PRNGKey(0)
    k_params, k_s, k_a = jax.random.split(key, 3)

    s_dim, a_dim, hidden_dim, batch = 6, 3, 32, 4
    critic = CriticPallas(s_dim, a_dim, hidden_dim, k_params)

    s = jax.random.normal(k_s, (batch, s_dim), jnp.float32)
    a = jax.random.normal(k_a, (batch, a_dim), jnp.float32)

    q = critic(s, a)
    jax.block_until_ready(q)

    q_ref = critic.reference(s, a)
    assert q.shape == (batch, 1), q.shape
    assert jnp.allclose(q, q_ref, atol=1e-5, rtol=1e-5), (q, q_ref)

    # Also exercise the multi-tile (batch-grid) path.
    k_s2, k_a2 = jax.random.split(k_s)
    B2 = 300
    s2 = jax.random.normal(k_s2, (B2, s_dim), jnp.float32)
    a2 = jax.random.normal(k_a2, (B2, a_dim), jnp.float32)
    q2 = critic(s2, a2)
    jax.block_until_ready(q2)
    assert q2.shape == (B2, 1), q2.shape
    assert jnp.allclose(q2, critic.reference(s2, a2), atol=1e-5, rtol=1e-5)

    print("KERNEL_OK")
</pallas_src>

<mosaic_0001>
module attributes {stable_mosaic.version = 11 : i64} {
  func.func @_critic_kernel(%arg0: i32, %arg1: memref<8x128xf32, #tpu.memory_space<vmem>>, %arg2: memref<8x128xf32, #tpu.memory_space<vmem>>, %arg3: memref<128x128xf32, #tpu.memory_space<vmem>>, %arg4: memref<128x128xf32, #tpu.memory_space<vmem>>, %arg5: memref<1x128xf32, #tpu.memory_space<vmem>>, %arg6: memref<128x128xf32, #tpu.memory_space<vmem>>, %arg7: memref<1x128xf32, #tpu.memory_space<vmem>>, %arg8: memref<128x128xf32, #tpu.memory_space<vmem>>, %arg9: memref<1x128xf32, #tpu.memory_space<vmem>>, %arg10: memref<128x128xf32, #tpu.memory_space<vmem>>, %arg11: memref<1x128xf32, #tpu.memory_space<vmem>>, %arg12: memref<8x128xf32, #tpu.memory_space<vmem>>) attributes {dimension_semantics = [#tpu.dimension_semantics<parallel>], iteration_bounds = array<i64: 1>, scalar_prefetch = 0 : i64, scratch_operands = 0 : i64, tpu.core_type = #tpu.core_type<tc>, window_params = [{transform_indices = @transform_0, window_bounds = array<i64: 8, 128>}, {transform_indices = @transform_1, window_bounds = array<i64: 8, 128>}, {pipeline_mode = #tpu.pipeline_mode<synchronous>, transform_indices = @transform_2, window_bounds = array<i64: 128, 128>}, {pipeline_mode = #tpu.pipeline_mode<synchronous>, transform_indices = @transform_3, window_bounds = array<i64: 128, 128>}, {pipeline_mode = #tpu.pipeline_mode<synchronous>, transform_indices = @transform_4, window_bounds = array<i64: 1, 128>}, {pipeline_mode = #tpu.pipeline_mode<synchronous>, transform_indices = @transform_5, window_bounds = array<i64: 128, 128>}, {pipeline_mode = #tpu.pipeline_mode<synchronous>, transform_indices = @transform_6, window_bounds = array<i64: 1, 128>}, {pipeline_mode = #tpu.pipeline_mode<synchronous>, transform_indices = @transform_7, window_bounds = array<i64: 128, 128>}, {pipeline_mode = #tpu.pipeline_mode<synchronous>, transform_indices = @transform_8, window_bounds = array<i64: 1, 128>}, {pipeline_mode = #tpu.pipeline_mode<synchronous>, transform_indices = @transform_9, window_bounds = array<i64: 128, 128>}, {pipeline_mode = #tpu.pipeline_mode<synchronous>, transform_indices = @transform_10, window_bounds = array<i64: 1, 128>}, {transform_indices = @transform_11, window_bounds = array<i64: 8, 128>}]} {
    %c0 = arith.constant 0 : index
    %c0_0 = arith.constant 0 : index
    %0 = vector.load %arg1[%c0, %c0_0] : memref<8x128xf32, #tpu.memory_space<vmem>>, vector<8x128xf32>
    %c0_1 = arith.constant 0 : index
    %c0_2 = arith.constant 0 : index
    %1 = vector.load %arg3[%c0_1, %c0_2] : memref<128x128xf32, #tpu.memory_space<vmem>>, vector<128x128xf32>
    %cst = arith.constant dense<0.000000e+00> : vector<8x128xf32>
    %2 = tpu.matmul %0, %1, %cst {dimension_numbers = #tpu.dot_dimension_numbers<[1], [0], [0], [1], [0, 0, 1, 1], [], []>} : vector<8x128xf32>, vector<128x128xf32>, vector<8x128xf32> -> vector<8x128xf32>
    %c0_3 = arith.constant 0 : index
    %c0_4 = arith.constant 0 : index
    %3 = vector.load %arg2[%c0_3, %c0_4] : memref<8x128xf32, #tpu.memory_space<vmem>>, vector<8x128xf32>
    %c0_5 = arith.constant 0 : index
    %c0_6 = arith.constant 0 : index
    %4 = vector.load %arg4[%c0_5, %c0_6] : memref<128x128xf32, #tpu.memory_space<vmem>>, vector<128x128xf32>
    %cst_7 = arith.constant dense<0.000000e+00> : vector<8x128xf32>
    %5 = tpu.matmul %3, %4, %cst_7 {dimension_numbers = #tpu.dot_dimension_numbers<[1], [0], [0], [1], [0, 0, 1, 1], [], []>} : vector<8x128xf32>, vector<128x128xf32>, vector<8x128xf32> -> vector<8x128xf32>
    %6 = arith.addf %2, %5 : vector<8x128xf32>
    %c0_8 = arith.constant 0 : index
    %c0_9 = arith.constant 0 : index
    %7 = vector.load %arg5[%c0_8, %c0_9] : memref<1x128xf32, #tpu.memory_space<vmem>>, vector<1x128xf32>
    %8 = vector.broadcast %7 : vector<1x128xf32> to vector<8x128xf32>
    %9 = arith.addf %6, %8 : vector<8x128xf32>
    %cst_10 = arith.constant 0.000000e+00 : f32
    %10 = vector.broadcast %cst_10 : f32 to vector<8x128xf32>
    %11 = arith.maximumf %9, %10 : vector<8x128xf32>
    %c0_11 = arith.constant 0 : index
    %c0_12 = arith.constant 0 : index
    %12 = vector.load %arg6[%c0_11, %c0_12] : memref<128x128xf32, #tpu.memory_space<vmem>>, vector<128x128xf32>
    %cst_13 = arith.constant dense<0.000000e+00> : vector<8x128xf32>
    %13 = tpu.matmul %11, %12, %cst_13 {dimension_numbers = #tpu.dot_dimension_numbers<[1], [0], [0], [1], [0, 0, 1, 1], [], []>} : vector<8x128xf32>, vector<128x128xf32>, vector<8x128xf32> -> vector<8x128xf32>
    %c0_14 = arith.constant 0 : index
    %c0_15 = arith.constant 0 : index
    %14 = vector.load %arg7[%c0_14, %c0_15] : memref<1x128xf32, #tpu.memory_space<vmem>>, vector<1x128xf32>
    %15 = vector.broadcast %14 : vector<1x128xf32> to vector<8x128xf32>
    %16 = arith.addf %13, %15 : vector<8x128xf32>
    %cst_16 = arith.constant 0.000000e+00 : f32
    %17 = vector.broadcast %cst_16 : f32 to vector<8x128xf32>
    %18 = arith.maximumf %16, %17 : vector<8x128xf32>
    %c0_17 = arith.constant 0 : index
    %c0_18 = arith.constant 0 : index
    %19 = vector.load %arg8[%c0_17, %c0_18] : memref<128x128xf32, #tpu.memory_space<vmem>>, vector<128x128xf32>
    %cst_19 = arith.constant dense<0.000000e+00> : vector<8x128xf32>
    %20 = tpu.matmul %18, %19, %cst_19 {dimension_numbers = #tpu.dot_dimension_numbers<[1], [0], [0], [1], [0, 0, 1, 1], [], []>} : vector<8x128xf32>, vector<128x128xf32>, vector<8x128xf32> -> vector<8x128xf32>
    %c0_20 = arith.constant 0 : index
    %c0_21 = arith.constant 0 : index
    %21 = vector.load %arg9[%c0_20, %c0_21] : memref<1x128xf32, #tpu.memory_space<vmem>>, vector<1x128xf32>
    %22 = vector.broadcast %21 : vector<1x128xf32> to vector<8x128xf32>
    %23 = arith.addf %20, %22 : vector<8x128xf32>
    %cst_22 = arith.constant 0.000000e+00 : f32
    %24 = vector.broadcast %cst_22 : f32 to vector<8x128xf32>
    %25 = arith.maximumf %23, %24 : vector<8x128xf32>
    %c0_23 = arith.constant 0 : index
    %c0_24 = arith.constant 0 : index
    %26 = vector.load %arg10[%c0_23, %c0_24] : memref<128x128xf32, #tpu.memory_space<vmem>>, vector<128x128xf32>
    %cst_25 = arith.constant dense<0.000000e+00> : vector<8x128xf32>
    %27 = tpu.matmul %25, %26, %cst_25 {dimension_numbers = #tpu.dot_dimension_numbers<[1], [0], [0], [1], [0, 0, 1, 1], [], []>} : vector<8x128xf32>, vector<128x128xf32>, vector<8x128xf32> -> vector<8x128xf32>
    %c0_26 = arith.constant 0 : index
    %c0_27 = arith.constant 0 : index
    %28 = vector.load %arg11[%c0_26, %c0_27] : memref<1x128xf32, #tpu.memory_space<vmem>>, vector<1x128xf32>
    %29 = vector.broadcast %28 : vector<1x128xf32> to vector<8x128xf32>
    %30 = arith.addf %27, %29 : vector<8x128xf32>
    %c0_28 = arith.constant 0 : index
    %c0_29 = arith.constant 0 : index
    %31 = vector.load %arg12[%c0_28, %c0_29] : memref<8x128xf32, #tpu.memory_space<vmem>>, vector<8x128xf32>
    tpu.vector_store %arg12[%c0_28, %c0_29], %30 {strides = array<i32>} : memref<8x128xf32, #tpu.memory_space<vmem>>, vector<8x128xf32>,
    return
  }
  func.func @transform_0(%arg0: i32) -> (i32, i32) {
    %c0_i32 = arith.constant 0 : i32
    %c0_i32_0 = arith.constant 0 : i32
    return %arg0, %c0_i32 : i32, i32
  }
  func.func @transform_1(%arg0: i32) -> (i32, i32) {
    %c0_i32 = arith.constant 0 : i32
    %c0_i32_0 = arith.constant 0 : i32
    return %arg0, %c0_i32 : i32, i32
  }
  func.func @transform_2(%arg0: i32) -> (i32, i32) {
    %c0_i32 = arith.constant 0 : i32
    %c0_i32_0 = arith.constant 0 : i32
    %c0_i32_1 = arith.constant 0 : i32
    return %c0_i32, %c0_i32_0 : i32, i32
  }
  func.func @transform_3(%arg0: i32) -> (i32, i32) {
    %c0_i32 = arith.constant 0 : i32
    %c0_i32_0 = arith.constant 0 : i32
    %c0_i32_1 = arith.constant 0 : i32
    return %c0_i32, %c0_i32_0 : i32, i32
  }
  func.func @transform_4(%arg0: i32) -> (i32, i32) {
    %c0_i32 = arith.constant 0 : i32
    %c0_i32_0 = arith.constant 0 : i32
    %c0_i32_1 = arith.constant 0 : i32
    return %c0_i32, %c0_i32_0 : i32, i32
  }
  func.func @transform_5(%arg0: i32) -> (i32, i32) {
    %c0_i32 = arith.constant 0 : i32
    %c0_i32_0 = arith.constant 0 : i32
    %c0_i32_1 = arith.constant 0 : i32
    return %c0_i32, %c0_i32_0 : i32, i32
  }
  func.func @transform_6(%arg0: i32) -> (i32, i32) {
    %c0_i32 = arith.constant 0 : i32
    %c0_i32_0 = arith.constant 0 : i32
    %c0_i32_1 = arith.constant 0 : i32
    return %c0_i32, %c0_i32_0 : i32, i32
  }
  func.func @transform_7(%arg0: i32) -> (i32, i32) {
    %c0_i32 = arith.constant 0 : i32
    %c0_i32_0 = arith.constant 0 : i32
    %c0_i32_1 = arith.constant 0 : i32
    return %c0_i32, %c0_i32_0 : i32, i32
  }
  func.func @transform_8(%arg0: i32) -> (i32, i32) {
    %c0_i32 = arith.constant 0 : i32
    %c0_i32_0 = arith.constant 0 : i32
    %c0_i32_1 = arith.constant 0 : i32
    return %c0_i32, %c0_i32_0 : i32, i32
  }
  func.func @transform_9(%arg0: i32) -> (i32, i32) {
    %c0_i32 = arith.constant 0 : i32
    %c0_i32_0 = arith.constant 0 : i32
    %c0_i32_1 = arith.constant 0 : i32
    return %c0_i32, %c0_i32_0 : i32, i32
  }
  func.func @transform_10(%arg0: i32) -> (i32, i32) {
    %c0_i32 = arith.constant 0 : i32
    %c0_i32_0 = arith.constant 0 : i32
    %c0_i32_1 = arith.constant 0 : i32
    return %c0_i32, %c0_i32_0 : i32, i32
  }
  func.func @transform_11(%arg0: i32) -> (i32, i32) {
    %c0_i32 = arith.constant 0 : i32
    %c0_i32_0 = arith.constant 0 : i32
    return %arg0, %c0_i32 : i32, i32
  }
}

</mosaic_0001>

<llo_original>
// kernel: tpu_custom_call.1
$region0: #{tpu_custom_call.1}
  #allocation0 [shape = 'u32[]', space=smem, size = 0x4, offset = 0x4, fixed_abs, tag = 'smem constant byte address 0x4 - core index']
  #allocation1 [shape = 'u32[144,128]{1,0:T(1,128)}', space=vmem, size = 0x12000, scoped, tag = 'internal scratch']
  %s0 = inlined_call_operand.hbm [shape: f32[8,128], index: 0, kind: input, shape index: {}]
  %s1 = inlined_call_operand.hbm [shape: f32[8,128], index: 1, kind: input, shape index: {}]
  %s2 = inlined_call_operand.hbm [shape: f32[128,128], index: 2, kind: input, shape index: {}]
  %s3 = inlined_call_operand.hbm [shape: f32[128,128], index: 3, kind: input, shape index: {}]
  %s4 = inlined_call_operand.vmem [shape: f32[1,128], index: 4, kind: input, shape index: {}]
  %s5 = inlined_call_operand.hbm [shape: f32[128,128], index: 5, kind: input, shape index: {}]
  %s6 = inlined_call_operand.vmem [shape: f32[1,128], index: 6, kind: input, shape index: {}]
  %s7 = inlined_call_operand.hbm [shape: f32[128,128], index: 7, kind: input, shape index: {}]
  %s8 = inlined_call_operand.vmem [shape: f32[1,128], index: 8, kind: input, shape index: {}]
  %s9 = inlined_call_operand.hbm [shape: f32[128,128], index: 9, kind: input, shape index: {}]
  %s10 = inlined_call_operand.vmem [shape: f32[1,128], index: 10, kind: input, shape index: {}]
  %s11 = inlined_call_operand.hbm [shape: f32[8,128], index: 11, kind: output, shape index: {}]
  %s12 = sld [smem:[#allocation0]]
  $region82: #{tpu_custom_call.1} parent=0
    _
  %s14 = ssub.s32 1, %s12
  %s15 = scalar_select 0, %s14, %s12
  $region1: #{tpu_custom_call.1} parent=0
    #allocation2 [shape = 'u8[4096]{0}', space=vmem, size = 0x1000, scoped, tag = 'input window, operand 0, single buffered']
    #allocation3 [shape = 's32[1]{0}', space=sflag, size = 0x4, scoped, tag = 'scoped memory for tpu_custom_call.1']
    #allocation4 [shape = 's32[1]{0}', space=sflag, size = 0x4, scoped, tag = 'scoped memory for tpu_custom_call.1']
    #allocation5 [shape = 'u8[4096]{0}', space=vmem, size = 0x1000, scoped, tag = 'input window, operand 1, single buffered']
    #allocation6 [shape = 's32[1]{0}', space=sflag, size = 0x4, scoped, tag = 'scoped memory for tpu_custom_call.1']
    #allocation7 [shape = 'u8[65536]{0}', space=vmem, size = 0x10000, scoped, tag = 'input window, operand 2, single buffered']
    #allocation8 [shape = 'u8[65536]{0}', space=vmem, size = 0x10000, scoped, tag = 'input window, operand 3, single buffered']
    #allocation9 [shape = 's32[1]{0}', space=sflag, size = 0x4, scoped, tag = 'scoped memory for tpu_custom_call.1']
    #allocation10 [shape = 'u8[65536]{0}', space=vmem, size = 0x10000, scoped, tag = 'input window, operand 5, single buffered']
    #allocation11 [shape = 'u8[65536]{0}', space=vmem, size = 0x10000, scoped, tag = 'input window, operand 7, single buffered']
    #allocation12 [shape = 's32[1]{0}', space=sflag, size = 0x4, scoped, tag = 'scoped memory for tpu_custom_call.1']
    #allocation13 [shape = 'u8[65536]{0}', space=vmem, size = 0x10000, scoped, tag = 'input window, operand 9, single buffered']
    #allocation14 [shape = 'u8[4096]{0}', space=vmem, size = 0x1000, scoped, tag = 'output window, operand 0, single buffered']
    %16 = vsyncpa [#allocation3], 0
    %17 = vsyncpa [#allocation6], 0
    %18 = vsyncpa [#allocation9], 0
    %19 = vsyncpa [#allocation12], 0
    %20 = vsyncpa [#allocation4], 0
    // Predicated region
    $region2: #{tpu_custom_call.1} parent=1 // pred_check
      _
    $region3: #{tpu_custom_call.1} parent=1 // pred_check_branch
      %22 = sbr.rel (0) target = $region5
    $region4: #{tpu_custom_call.1} parent=1 // pred_region
      %s24 = ssub.s32 128, 128
      %25 = vsyncadd [#allocation3], %s24
      %s27 = sshll.u32 [#allocation2], 4
      %s28 = int_to_ptr.vmem [resolvable:$true] %s27
      %30 = dma.hbm_to_vmem [thread:$0]  %s0, 128, %s28, [#allocation3]
    $region5: #{tpu_custom_call.1} parent=1 // pred_fallthru
      _
    // Predicated region
    $region6: #{tpu_custom_call.1} parent=1 // pred_check
      _
    $region7: #{tpu_custom_call.1} parent=1 // pred_check_branch
      %32 = sbr.rel (0) target = $region9
    $region8: #{tpu_custom_call.1} parent=1 // pred_region
      %s34 = ssub.s32 128, 128
      %35 = vsyncadd [#allocation6], %s34
      %s37 = sshll.u32 [#allocation5], 4
      %s38 = int_to_ptr.vmem [resolvable:$true] %s37
      %40 = dma.hbm_to_vmem [thread:$0]  %s1, 128, %s38, [#allocation6]
    $region9: #{tpu_custom_call.1} parent=1 // pred_fallthru
      _
    // Predicated region
    $region10: #{tpu_custom_call.1} parent=1 // pred_check
      _
    $region11: #{tpu_custom_call.1} parent=1 // pred_check_branch
      %42 = sbr.rel (0) target = $region13
    $region12: #{tpu_custom_call.1} parent=1 // pred_region
      %s44 = ssub.s32 2048, 2048
      %45 = vsyncadd [#allocation6], %s44
      %s46 = sshll.u32 [#allocation7], 4
      %s47 = int_to_ptr.vmem [resolvable:$true] %s46
      %52 = dma.hbm_to_vmem [thread:$0]  %s2, 2048, %s47, [#allocation6], 128, 128, 8
    $region13: #{tpu_custom_call.1} parent=1 // pred_fallthru
      _
    // Predicated region
    $region14: #{tpu_custom_call.1} parent=1 // pred_check
      _
    $region15: #{tpu_custom_call.1} parent=1 // pred_check_branch
      %54 = sbr.rel (0) target = $region17
    $region16: #{tpu_custom_call.1} parent=1 // pred_region
      %s56 = ssub.s32 2048, 2048
      %57 = vsyncadd [#allocation9], %s56
      %s58 = sshll.u32 [#allocation8], 4
      %s59 = int_to_ptr.vmem [resolvable:$true] %s58
      %64 = dma.hbm_to_vmem [thread:$0]  %s3, 2048, %s59, [#allocation9], 128, 128, 8
    $region17: #{tpu_custom_call.1} parent=1 // pred_fallthru
      _
    // Predicated region
    $region18: #{tpu_custom_call.1} parent=1 // pred_check
      _
    $region19: #{tpu_custom_call.1} parent=1 // pred_check_branch
      %66 = sbr.rel (0) target = $region21
    $region20: #{tpu_custom_call.1} parent=1 // pred_region
      _
    $region21: #{tpu_custom_call.1} parent=1 // pred_fallthru
      _
    // Predicated region
    $region22: #{tpu_custom_call.1} parent=1 // pred_check
      _
    $region23: #{tpu_custom_call.1} parent=1 // pred_check_branch
      %68 = sbr.rel (0) target = $region25
    $region24: #{tpu_custom_call.1} parent=1 // pred_region
      %s70 = ssub.s32 2048, 2048
      %71 = vsyncadd [#allocation9], %s70
      %s72 = sshll.u32 [#allocation10], 4
      %s73 = int_to_ptr.vmem [resolvable:$true] %s72
      %78 = dma.hbm_to_vmem [thread:$0]  %s5, 2048, %s73, [#allocation9], 128, 128, 8
    $region25: #{tpu_custom_call.1} parent=1 // pred_fallthru
      _
    // Predicated region
    $region26: #{tpu_custom_call.1} parent=1 // pred_check
      _
    $region27: #{tpu_custom_call.1} parent=1 // pred_check_branch
      %80 = sbr.rel (0) target = $region29
    $region28: #{tpu_custom_call.1} parent=1 // pred_region
      _
    $region29: #{tpu_custom_call.1} parent=1 // pred_fallthru
      _
    // Predicated region
    $region30: #{tpu_custom_call.1} parent=1 // pred_check
      _
    $region31: #{tpu_custom_call.1} parent=1 // pred_check_branch
      %82 = sbr.rel (0) target = $region33
    $region32: #{tpu_custom_call.1} parent=1 // pred_region
      %s84 = ssub.s32 2048, 2048
      %85 = vsyncadd [#allocation12], %s84
      %s86 = sshll.u32 [#allocation11], 4
      %s87 = int_to_ptr.vmem [resolvable:$true] %s86
      %92 = dma.hbm_to_vmem [thread:$0]  %s7, 2048, %s87, [#allocation12], 128, 128, 8
    $region33: #{tpu_custom_call.1} parent=1 // pred_fallthru
      _
    // Predicated region
    $region34: #{tpu_custom_call.1} parent=1 // pred_check
      _
    $region35: #{tpu_custom_call.1} parent=1 // pred_check_branch
      %94 = sbr.rel (0) target = $region37
    $region36: #{tpu_custom_call.1} parent=1 // pred_region
      _
    $region37: #{tpu_custom_call.1} parent=1 // pred_fallthru
      _
    // Predicated region
    $region38: #{tpu_custom_call.1} parent=1 // pred_check
      _
    $region39: #{tpu_custom_call.1} parent=1 // pred_check_branch
      %96 = sbr.rel (0) target = $region41
    $region40: #{tpu_custom_call.1} parent=1 // pred_region
      %s98 = ssub.s32 2048, 2048
      %99 = vsyncadd [#allocation12], %s98
      %s100 = sshll.u32 [#allocation13], 4
      %s101 = int_to_ptr.vmem [resolvable:$true] %s100
      %106 = dma.hbm_to_vmem [thread:$0]  %s9, 2048, %s101, [#allocation12], 128, 128, 8
    $region41: #{tpu_custom_call.1} parent=1 // pred_fallthru
      _
    // Predicated region
    $region42: #{tpu_custom_call.1} parent=1 // pred_check
      _
    $region43: #{tpu_custom_call.1} parent=1 // pred_check_branch
      %108 = sbr.rel (0) target = $region45
    $region44: #{tpu_custom_call.1} parent=1 // pred_region
      _
    $region45: #{tpu_custom_call.1} parent=1 // pred_fallthru
      _
    // Predicated region
    $region46: #{tpu_custom_call.1} parent=1 // pred_check
      _
    $region47: #{tpu_custom_call.1} parent=1 // pred_check_branch
      %110 = sbr.rel (0) target = $region49
    $region48: #{tpu_custom_call.1} parent=1 // pred_region
      %111 = dma.done [#allocation3], 128
    $region49: #{tpu_custom_call.1} parent=1 // pred_fallthru
      _
    // Predicated region
    $region50: #{tpu_custom_call.1} parent=1 // pred_check
      _
    $region51: #{tpu_custom_call.1} parent=1 // pred_check_branch
      %113 = sbr.rel (0) target = $region53
    $region52: #{tpu_custom_call.1} parent=1 // pred_region
      %114 = dma.done [#allocation6], 128
    $region53: #{tpu_custom_call.1} parent=1 // pred_fallthru
      _
    // Predicated region
    $region54: #{tpu_custom_call.1} parent=1 // pred_check
      _
    $region55: #{tpu_custom_call.1} parent=1 // pred_check_branch
      %116 = sbr.rel (0) target = $region57
    $region56: #{tpu_custom_call.1} parent=1 // pred_region
      %117 = dma.done [#allocation6], 2048
    $region57: #{tpu_custom_call.1} parent=1 // pred_fallthru
      _
    // Predicated region
    $region58: #{tpu_custom_call.1} parent=1 // pred_check
      _
    $region59: #{tpu_custom_call.1} parent=1 // pred_check_branch
      %119 = sbr.rel (0) target = $region61
    $region60: #{tpu_custom_call.1} parent=1 // pred_region
      %120 = dma.done [#allocation9], 2048
    $region61: #{tpu_custom_call.1} parent=1 // pred_fallthru
      _
    // Predicated region
    $region62: #{tpu_custom_call.1} parent=1 // pred_check
      _
    $region63: #{tpu_custom_call.1} parent=1 // pred_check_branch
      %122 = sbr.rel (0) target = $region65
    $region64: #{tpu_custom_call.1} parent=1 // pred_region
      %123 = dma.done [#allocation9], 2048
    $region65: #{tpu_custom_call.1} parent=1 // pred_fallthru
      _
    // Predicated region
    $region66: #{tpu_custom_call.1} parent=1 // pred_check
      _
    $region67: #{tpu_custom_call.1} parent=1 // pred_check_branch
      %125 = sbr.rel (0) target = $region69
    $region68: #{tpu_custom_call.1} parent=1 // pred_region
      %126 = dma.done [#allocation12], 2048
    $region69: #{tpu_custom_call.1} parent=1 // pred_fallthru
      _
    // Predicated region
    $region70: #{tpu_custom_call.1} parent=1 // pred_check
      _
    $region71: #{tpu_custom_call.1} parent=1 // pred_check_branch
      %128 = sbr.rel (0) target = $region73
    $region72: #{tpu_custom_call.1} parent=1 // pred_region
      %129 = dma.done [#allocation12], 2048
    $region73: #{tpu_custom_call.1} parent=1 // pred_fallthru
      _
    %v130 = vld [vmem:[#allocation2] sm:$0xff]
    %v131 = vld [vmem:[#allocation7] sm:$0xff]
    %v132 = vld [vmem:[#allocation7 + $0x8] sm:$0xff]
    %v133 = vld [vmem:[#allocation7 + $0x10] sm:$0xff]
    %v134 = vld [vmem:[#allocation7 + $0x18] sm:$0xff]
    %v135 = vld [vmem:[#allocation7 + $0x20] sm:$0xff]
    %v136 = vld [vmem:[#allocation7 + $0x28] sm:$0xff]
    %v137 = vld [vmem:[#allocation7 + $0x30] sm:$0xff]
    %v138 = vld [vmem:[#allocation7 + $0x38] sm:$0xff]
    %v139 = vld [vmem:[#allocation7 + $0x40] sm:$0xff]
    %v140 = vld [vmem:[#allocation7 + $0x48] sm:$0xff]
    %v141 = vld [vmem:[#allocation7 + $0x50] sm:$0xff]
    %v142 = vld [vmem:[#allocation7 + $0x58] sm:$0xff]
    %v143 = vld [vmem:[#allocation7 + $0x60] sm:$0xff]
    %v144 = vld [vmem:[#allocation7 + $0x68] sm:$0xff]
    %v145 = vld [vmem:[#allocation7 + $0x70] sm:$0xff]
    %v146 = vld [vmem:[#allocation7 + $0x78] sm:$0xff]
    %v147 = vld [vmem:[#allocation5] sm:$0xff]
    %v148 = vld [vmem:[#allocation8] sm:$0xff]
    %v149 = vld [vmem:[#allocation8 + $0x8] sm:$0xff]
    %v150 = vld [vmem:[#allocation8 + $0x10] sm:$0xff]
    %v151 = vld [vmem:[#allocation8 + $0x18] sm:$0xff]
    %v152 = vld [vmem:[#allocation8 + $0x20] sm:$0xff]
    %v153 = vld [vmem:[#allocation8 + $0x28] sm:$0xff]
    %v154 = vld [vmem:[#allocation8 + $0x30] sm:$0xff]
    %v155 = vld [vmem:[#allocation8 + $0x38] sm:$0xff]
    %v156 = vld [vmem:[#allocation8 + $0x40] sm:$0xff]
    %v157 = vld [vmem:[#allocation8 + $0x48] sm:$0xff]
    %v158 = vld [vmem:[#allocation8 + $0x50] sm:$0xff]
    %v159 = vld [vmem:[#allocation8 + $0x58] sm:$0xff]
    %v160 = vld [vmem:[#allocation8 + $0x60] sm:$0xff]
    %v161 = vld [vmem:[#allocation8 + $0x68] sm:$0xff]
    %v162 = vld [vmem:[#allocation8 + $0x70] sm:$0xff]
    %v163 = vld [vmem:[#allocation8 + $0x78] sm:$0xff]
    %164 = vmatprep.subr.mxu0 0.0
    %165 = vmatpush1.msra.mxu0 %v148
    %166 = vmatprep.subr.mxu0 0.0
    %167 = vmatpush1.msra.mxu0 %v149
    %168 = vmatprep.subr.mxu0 0.0
    %169 = vmatpush1.msra.mxu0 %v150
    %170 = vmatprep.subr.mxu0 0.0
    %171 = vmatpush1.msra.mxu0 %v151
    %172 = vmatprep.subr.mxu0 0.0
    %173 = vmatpush1.msra.mxu0 %v152
    %174 = vmatprep.subr.mxu0 0.0
    %175 = vmatpush1.msra.mxu0 %v153
    %176 = vmatprep.subr.mxu0 0.0
    %177 = vmatpush1.msra.mxu0 %v154
    %178 = vmatprep.subr.mxu0 0.0
    %179 = vmatpush1.msra.mxu0 %v155
    %180 = vmatprep.subr.mxu0 0.0
    %181 = vmatpush1.msra.mxu0 %v156
    %182 = vmatprep.subr.mxu0 0.0
    %183 = vmatpush1.msra.mxu0 %v157
    %184 = vmatprep.subr.mxu0 0.0
    %185 = vmatpush1.msra.mxu0 %v158
    %186 = vmatprep.subr.mxu0 0.0
    %187 = vmatpush1.msra.mxu0 %v159
    %188 = vmatprep.subr.mxu0 0.0
    %189 = vmatpush1.msra.mxu0 %v160
    %190 = vmatprep.subr.mxu0 0.0
    %191 = vmatpush1.msra.mxu0 %v161
    %192 = vmatprep.subr.mxu0 0.0
    %193 = vmatpush1.msra.mxu0 %v162
    %194 = vmatprep.subr.mxu0 0.0
    %195 = vmatpush1.msra.mxu0 %v163
    %196 = vmatprep.subr.mxu0 0.0
    %197 = vmatpush1.msra.mxu0 0.0
    %198 = vmatprep.subr.mxu0 0.0
    %199 = vmatpush1.msra.mxu0 0.0
    %200 = vmatprep.subr.mxu0 0.0
    %201 = vmatpush1.msra.mxu0 0.0
    %202 = vmatprep.subr.mxu0 0.0
    %203 = vmatpush1.msra.mxu0 0.0
    %204 = vmatprep.subr.mxu0 0.0
    %205 = vmatpush1.msra.mxu0 0.0
    %206 = vmatprep.subr.mxu0 0.0
    %207 = vmatpush1.msra.mxu0 0.0
    %208 = vmatprep.subr.mxu0 0.0
    %209 = vmatpush1.msra.mxu0 0.0
    %210 = vmatprep.subr.mxu0 0.0
    %211 = vmatpush1.msra.mxu0 0.0
    %212 = vmatprep.subr.mxu0 0.0
    %213 = vmatpush1.msra.mxu0 0.0
    %214 = vmatprep.subr.mxu0 0.0
    %215 = vmatpush1.msra.mxu0 0.0
    %216 = vmatprep.subr.mxu0 0.0
    %217 = vmatpush1.msra.mxu0 0.0
    %218 = vmatprep.subr.mxu0 0.0
    %219 = vmatpush1.msra.mxu0 0.0
    %220 = vmatprep.subr.mxu0 0.0
    %221 = vmatpush1.msra.mxu0 0.0
    %222 = vmatprep.subr.mxu0 0.0
    %223 = vmatpush1.msra.mxu0 0.0
    %224 = vmatprep.subr.mxu0 0.0
    %225 = vmatpush1.msra.mxu0 0.0
    %226 = vmatprep.subr.mxu0 0.0
    %227 = vmatpush1.msra.mxu0 0.0
    %228 = vmatprep.mubr.f32.mxu0 0.0
    %229 = vmatmul.mubr.f32.gmra.mrb[0].mxu0 %v147
    %v230 = vpop.f32.mrb[0].mxu0
    %v231 = vadd.f32 0.0, %v230
    %v232 = vpop.f32.mrb[0].mxu0
    %233 = vdwg.mxu0
    %234 = vmatprep.subr.mxu0 0.0
    %235 = vmatpush1.msra.mxu0 %v131
    %236 = vmatprep.subr.mxu0 0.0
    %237 = vmatpush1.msra.mxu0 %v132
    %238 = vmatprep.subr.mxu0 0.0
    %239 = vmatpush1.msra.mxu0 %v133
    %240 = vmatprep.subr.mxu0 0.0
    %241 = vmatpush1.msra.mxu0 %v134
    %242 = vmatprep.subr.mxu0 0.0
    %243 = vmatpush1.msra.mxu0 %v135
    %244 = vmatprep.subr.mxu0 0.0
    %245 = vmatpush1.msra.mxu0 %v136
    %246 = vmatprep.subr.mxu0 0.0
    %247 = vmatpush1.msra.mxu0 %v137
    %248 = vmatprep.subr.mxu0 0.0
    %249 = vmatpush1.msra.mxu0 %v138
    %250 = vmatprep.subr.mxu0 0.0
    %251 = vmatpush1.msra.mxu0 %v139
    %252 = vmatprep.subr.mxu0 0.0
    %253 = vmatpush1.msra.mxu0 %v140
    %254 = vmatprep.subr.mxu0 0.0
    %255 = vmatpush1.msra.mxu0 %v141
    %256 = vmatprep.subr.mxu0 0.0
    %257 = vmatpush1.msra.mxu0 %v142
    %258 = vmatprep.subr.mxu0 0.0
    %259 = vmatpush1.msra.mxu0 %v143
    %260 = vmatprep.subr.mxu0 0.0
    %261 = vmatpush1.msra.mxu0 %v144
    %262 = vmatprep.subr.mxu0 0.0
    %263 = vmatpush1.msra.mxu0 %v145
    %264 = vmatprep.subr.mxu0 0.0
    %265 = vmatpush1.msra.mxu0 %v146
    %266 = vmatprep.subr.mxu0 0.0
    %267 = vmatpush1.msra.mxu0 0.0
    %268 = vmatprep.subr.mxu0 0.0
    %269 = vmatpush1.msra.mxu0 0.0
    %270 = vmatprep.subr.mxu0 0.0
    %271 = vmatpush1.msra.mxu0 0.0
    %272 = vmatprep.subr.mxu0 0.0
    %273 = vmatpush1.msra.mxu0 0.0
    %274 = vmatprep.subr.mxu0 0.0
    %275 = vmatpush1.msra.mxu0 0.0
    %276 = vmatprep.subr.mxu0 0.0
    %277 = vmatpush1.msra.mxu0 0.0
    %278 = vmatprep.subr.mxu0 0.0
    %279 = vmatpush1.msra.mxu0 0.0
    %280 = vmatprep.subr.mxu0 0.0
    %281 = vmatpush1.msra.mxu0 0.0
    %282 = vmatprep.subr.mxu0 0.0
    %283 = vmatpush1.msra.mxu0 0.0
    %284 = vmatprep.subr.mxu0 0.0
    %285 = vmatpush1.msra.mxu0 0.0
    %286 = vmatprep.subr.mxu0 0.0
    %287 = vmatpush1.msra.mxu0 0.0
    %288 = vmatprep.subr.mxu0 0.0
    %289 = vmatpush1.msra.mxu0 0.0
    %290 = vmatprep.subr.mxu0 0.0
    %291 = vmatpush1.msra.mxu0 0.0
    %292 = vmatprep.subr.mxu0 0.0
    %293 = vmatpush1.msra.mxu0 0.0
    %294 = vmatprep.subr.mxu0 0.0
    %295 = vmatpush1.msra.mxu0 0.0
    %296 = vmatprep.subr.mxu0 0.0
    %297 = vmatpush1.msra.mxu0 0.0
    %298 = vmatprep.mubr.f32.mxu0 0.0
    %299 = vmatmul.mubr.f32.gmra.mrb[0].mxu0 %v130
    %v300 = vpop.f32.mrb[0].mxu0
    %v301 = vadd.f32 %v231, %v300
    %v302 = vpop.f32.mrb[0].mxu0
    %303 = vdwg.mxu0
    %v304 = vld [vmem:[%s4] sm:$0x1]
    %v306 = vlaneseq
    %v307 = vshrl.u32 %v306, 7
    %v308 = vsub.s32 0, %v307
    %v309 = vrot.slane %v304, %v308
    %v311 = vadd.f32 %v301, %v309
    %v312 = vmax.f32 %v311, 0.0
    %v313 = vld [vmem:[#allocation10] sm:$0xff]
    %v314 = vld [vmem:[#allocation10 + $0x8] sm:$0xff]
    %v315 = vld [vmem:[#allocation10 + $0x10] sm:$0xff]
    %v316 = vld [vmem:[#allocation10 + $0x18] sm:$0xff]
    %v317 = vld [vmem:[#allocation10 + $0x20] sm:$0xff]
    %v318 = vld [vmem:[#allocation10 + $0x28] sm:$0xff]
    %v319 = vld [vmem:[#allocation10 + $0x30] sm:$0xff]
    %v320 = vld [vmem:[#allocation10 + $0x38] sm:$0xff]
    %v321 = vld [vmem:[#allocation10 + $0x40] sm:$0xff]
    %v322 = vld [vmem:[#allocation10 + $0x48] sm:$0xff]
    %v323 = vld [vmem:[#allocation10 + $0x50] sm:$0xff]
    %v324 = vld [vmem:[#allocation10 + $0x58] sm:$0xff]
    %v325 = vld [vmem:[#allocation10 + $0x60] sm:$0xff]
    %v326 = vld [vmem:[#allocation10 + $0x68] sm:$0xff]
    %v327 = vld [vmem:[#allocation10 + $0x70] sm:$0xff]
    %v328 = vld [vmem:[#allocation10 + $0x78] sm:$0xff]
    %v329 = vld [vmem:[%s6] sm:$0x1]
    %v331 = vlaneseq
    %v332 = vshrl.u32 %v331, 7
    %v333 = vsub.s32 0, %v332
    %v334 = vrot.slane %v329, %v333
    %336 = vmatprep.subr.mxu0 0.0
    %337 = vmatpush1.msra.mxu0 %v313
    %338 = vmatprep.subr.mxu0 0.0
    %339 = vmatpush1.msra.mxu0 %v314
    %340 = vmatprep.subr.mxu0 0.0
    %341 = vmatpush1.msra.mxu0 %v315
    %342 = vmatprep.subr.mxu0 0.0
    %343 = vmatpush1.msra.mxu0 %v316
    %344 = vmatprep.subr.mxu0 0.0
    %345 = vmatpush1.msra.mxu0 %v317
    %346 = vmatprep.subr.mxu0 0.0
    %347 = vmatpush1.msra.mxu0 %v318
    %348 = vmatprep.subr.mxu0 0.0
    %349 = vmatpush1.msra.mxu0 %v319
    %350 = vmatprep.subr.mxu0 0.0
    %351 = vmatpush1.msra.mxu0 %v320
    %352 = vmatprep.subr.mxu0 0.0
    %353 = vmatpush1.msra.mxu0 %v321
    %354 = vmatprep.subr.mxu0 0.0
    %355 = vmatpush1.msra.mxu0 %v322
    %356 = vmatprep.subr.mxu0 0.0
    %357 = vmatpush1.msra.mxu0 %v323
    %358 = vmatprep.subr.mxu0 0.0
    %359 = vmatpush1.msra.mxu0 %v324
    %360 = vmatprep.subr.mxu0 0.0
    %361 = vmatpush1.msra.mxu0 %v325
    %362 = vmatprep.subr.mxu0 0.0
    %363 = vmatpush1.msra.mxu0 %v326
    %364 = vmatprep.subr.mxu0 0.0
    %365 = vmatpush1.msra.mxu0 %v327
    %366 = vmatprep.subr.mxu0 0.0
    %367 = vmatpush1.msra.mxu0 %v328
    %368 = vmatprep.subr.mxu0 0.0
    %369 = vmatpush1.msra.mxu0 0.0
    %370 = vmatprep.subr.mxu0 0.0
    %371 = vmatpush1.msra.mxu0 0.0
    %372 = vmatprep.subr.mxu0 0.0
    %373 = vmatpush1.msra.mxu0 0.0
    %374 = vmatprep.subr.mxu0 0.0
    %375 = vmatpush1.msra.mxu0 0.0
    %376 = vmatprep.subr.mxu0 0.0
    %377 = vmatpush1.msra.mxu0 0.0
    %378 = vmatprep.subr.mxu0 0.0
    %379 = vmatpush1.msra.mxu0 0.0
    %380 = vmatprep.subr.mxu0 0.0
    %381 = vmatpush1.msra.mxu0 0.0
    %382 = vmatprep.subr.mxu0 0.0
    %383 = vmatpush1.msra.mxu0 0.0
    %384 = vmatprep.subr.mxu0 0.0
    %385 = vmatpush1.msra.mxu0 0.0
    %386 = vmatprep.subr.mxu0 0.0
    %387 = vmatpush1.msra.mxu0 0.0
    %388 = vmatprep.subr.mxu0 0.0
    %389 = vmatpush1.msra.mxu0 0.0
    %390 = vmatprep.subr.mxu0 0.0
    %391 = vmatpush1.msra.mxu0 0.0
    %392 = vmatprep.subr.mxu0 0.0
    %393 = vmatpush1.msra.mxu0 0.0
    %394 = vmatprep.subr.mxu0 0.0
    %395 = vmatpush1.msra.mxu0 0.0
    %396 = vmatprep.subr.mxu0 0.0
    %397 = vmatpush1.msra.mxu0 0.0
    %398 = vmatprep.subr.mxu0 0.0
    %399 = vmatpush1.msra.mxu0 0.0
    %400 = vmatprep.mubr.f32.mxu0 0.0
    %401 = vmatmul.mubr.f32.gmra.mrb[0].mxu0 %v312
    %v402 = vpop.f32.mrb[0].mxu0
    %v403 = vadd.f32 %v334, %v402
    %v404 = vpop.f32.mrb[0].mxu0
    %405 = vdwg.mxu0
    %v406 = vmax.f32 %v403, 0.0
    %v407 = vld [vmem:[#allocation11] sm:$0xff]
    %v408 = vld [vmem:[#allocation11 + $0x8] sm:$0xff]
    %v409 = vld [vmem:[#allocation11 + $0x10] sm:$0xff]
    %v410 = vld [vmem:[#allocation11 + $0x18] sm:$0xff]
    %v411 = vld [vmem:[#allocation11 + $0x20] sm:$0xff]
    %v412 = vld [vmem:[#allocation11 + $0x28] sm:$0xff]
    %v413 = vld [vmem:[#allocation11 + $0x30] sm:$0xff]
    %v414 = vld [vmem:[#allocation11 + $0x38] sm:$0xff]
    %v415 = vld [vmem:[#allocation11 + $0x40] sm:$0xff]
    %v416 = vld [vmem:[#allocation11 + $0x48] sm:$0xff]
    %v417 = vld [vmem:[#allocation11 + $0x50] sm:$0xff]
    %v418 = vld [vmem:[#allocation11 + $0x58] sm:$0xff]
    %v419 = vld [vmem:[#allocation11 + $0x60] sm:$0xff]
    %v420 = vld [vmem:[#allocation11 + $0x68] sm:$0xff]
    %v421 = vld [vmem:[#allocation11 + $0x70] sm:$0xff]
    %v422 = vld [vmem:[#allocation11 + $0x78] sm:$0xff]
    %v423 = vld [vmem:[%s8] sm:$0x1]
    %v425 = vlaneseq
    %v426 = vshrl.u32 %v425, 7
    %v427 = vsub.s32 0, %v426
    %v428 = vrot.slane %v423, %v427
    %430 = vmatprep.subr.mxu0 0.0
    %431 = vmatpush1.msra.mxu0 %v407
    %432 = vmatprep.subr.mxu0 0.0
    %433 = vmatpush1.msra.mxu0 %v408
    %434 = vmatprep.subr.mxu0 0.0
    %435 = vmatpush1.msra.mxu0 %v409
    %436 = vmatprep.subr.mxu0 0.0
    %437 = vmatpush1.msra.mxu0 %v410
    %438 = vmatprep.subr.mxu0 0.0
    %439 = vmatpush1.msra.mxu0 %v411
    %440 = vmatprep.subr.mxu0 0.0
    %441 = vmatpush1.msra.mxu0 %v412
    %442 = vmatprep.subr.mxu0 0.0
    %443 = vmatpush1.msra.mxu0 %v413
    %444 = vmatprep.subr.mxu0 0.0
    %445 = vmatpush1.msra.mxu0 %v414
    %446 = vmatprep.subr.mxu0 0.0
    %447 = vmatpush1.msra.mxu0 %v415
    %448 = vmatprep.subr.mxu0 0.0
    %449 = vmatpush1.msra.mxu0 %v416
    %450 = vmatprep.subr.mxu0 0.0
    %451 = vmatpush1.msra.mxu0 %v417
    %452 = vmatprep.subr.mxu0 0.0
    %453 = vmatpush1.msra.mxu0 %v418
    %454 = vmatprep.subr.mxu0 0.0
    %455 = vmatpush1.msra.mxu0 %v419
    %456 = vmatprep.subr.mxu0 0.0
    %457 = vmatpush1.msra.mxu0 %v420
    %458 = vmatprep.subr.mxu0 0.0
    %459 = vmatpush1.msra.mxu0 %v421
    %460 = vmatprep.subr.mxu0 0.0
    %461 = vmatpush1.msra.mxu0 %v422
    %462 = vmatprep.subr.mxu0 0.0
    %463 = vmatpush1.msra.mxu0 0.0
    %464 = vmatprep.subr.mxu0 0.0
    %465 = vmatpush1.msra.mxu0 0.0
    %466 = vmatprep.subr.mxu0 0.0
    %467 = vmatpush1.msra.mxu0 0.0
    %468 = vmatprep.subr.mxu0 0.0
    %469 = vmatpush1.msra.mxu0 0.0
    %470 = vmatprep.subr.mxu0 0.0
    %471 = vmatpush1.msra.mxu0 0.0
    %472 = vmatprep.subr.mxu0 0.0
    %473 = vmatpush1.msra.mxu0 0.0
    %474 = vmatprep.subr.mxu0 0.0
    %475 = vmatpush1.msra.mxu0 0.0
    %476 = vmatprep.subr.mxu0 0.0
    %477 = vmatpush1.msra.mxu0 0.0
    %478 = vmatprep.subr.mxu0 0.0
    %479 = vmatpush1.msra.mxu0 0.0
    %480 = vmatprep.subr.mxu0 0.0
    %481 = vmatpush1.msra.mxu0 0.0
    %482 = vmatprep.subr.mxu0 0.0
    %483 = vmatpush1.msra.mxu0 0.0
    %484 = vmatprep.subr.mxu0 0.0
    %485 = vmatpush1.msra.mxu0 0.0
    %486 = vmatprep.subr.mxu0 0.0
    %487 = vmatpush1.msra.mxu0 0.0
    %488 = vmatprep.subr.mxu0 0.0
    %489 = vmatpush1.msra.mxu0 0.0
    %490 = vmatprep.subr.mxu0 0.0
    %491 = vmatpush1.msra.mxu0 0.0
    %492 = vmatprep.subr.mxu0 0.0
    %493 = vmatpush1.msra.mxu0 0.0
    %494 = vmatprep.mubr.f32.mxu0 0.0
    %495 = vmatmul.mubr.f32.gmra.mrb[0].mxu0 %v406
    %v496 = vpop.f32.mrb[0].mxu0
    %v497 = vadd.f32 %v428, %v496
    %v498 = vpop.f32.mrb[0].mxu0
    %499 = vdwg.mxu0
    %v500 = vmax.f32 %v497, 0.0
    %v501 = vld [vmem:[#allocation13] sm:$0xff]
    %v502 = vld [vmem:[#allocation13 + $0x8] sm:$0xff]
    %v503 = vld [vmem:[#allocation13 + $0x10] sm:$0xff]
    %v504 = vld [vmem:[#allocation13 + $0x18] sm:$0xff]
    %v505 = vld [vmem:[#allocation13 + $0x20] sm:$0xff]
    %v506 = vld [vmem:[#allocation13 + $0x28] sm:$0xff]
    %v507 = vld [vmem:[#allocation13 + $0x30] sm:$0xff]
    %v508 = vld [vmem:[#allocation13 + $0x38] sm:$0xff]
    %v509 = vld [vmem:[#allocation13 + $0x40] sm:$0xff]
    %v510 = vld [vmem:[#allocation13 + $0x48] sm:$0xff]
    %v511 = vld [vmem:[#allocation13 + $0x50] sm:$0xff]
    %v512 = vld [vmem:[#allocation13 + $0x58] sm:$0xff]
    %v513 = vld [vmem:[#allocation13 + $0x60] sm:$0xff]
    %v514 = vld [vmem:[#allocation13 + $0x68] sm:$0xff]
    %v515 = vld [vmem:[#allocation13 + $0x70] sm:$0xff]
    %v516 = vld [vmem:[#allocation13 + $0x78] sm:$0xff]
    %v517 = vld [vmem:[%s10] sm:$0x1]
    %v519 = vlaneseq
    %v520 = vshrl.u32 %v519, 7
    %v521 = vsub.s32 0, %v520
    %v522 = vrot.slane %v517, %v521
    %524 = vmatprep.subr.mxu0 0.0
    %525 = vmatpush1.msra.mxu0 %v501
    %526 = vmatprep.subr.mxu0 0.0
    %527 = vmatpush1.msra.mxu0 %v502
    %528 = vmatprep.subr.mxu0 0.0
    %529 = vmatpush1.msra.mxu0 %v503
    %530 = vmatprep.subr.mxu0 0.0
    %531 = vmatpush1.msra.mxu0 %v504
    %532 = vmatprep.subr.mxu0 0.0
    %533 = vmatpush1.msra.mxu0 %v505
    %534 = vmatprep.subr.mxu0 0.0
    %535 = vmatpush1.msra.mxu0 %v506
    %536 = vmatprep.subr.mxu0 0.0
    %537 = vmatpush1.msra.mxu0 %v507
    %538 = vmatprep.subr.mxu0 0.0
    %539 = vmatpush1.msra.mxu0 %v508
    %540 = vmatprep.subr.mxu0 0.0
    %541 = vmatpush1.msra.mxu0 %v509
    %542 = vmatprep.subr.mxu0 0.0
    %543 = vmatpush1.msra.mxu0 %v510
    %544 = vmatprep.subr.mxu0 0.0
    %545 = vmatpush1.msra.mxu0 %v511
    %546 = vmatprep.subr.mxu0 0.0
    %547 = vmatpush1.msra.mxu0 %v512
    %548 = vmatprep.subr.mxu0 0.0
    %549 = vmatpush1.msra.mxu0 %v513
    %550 = vmatprep.subr.mxu0 0.0
    %551 = vmatpush1.msra.mxu0 %v514
    %552 = vmatprep.subr.mxu0 0.0
    %553 = vmatpush1.msra.mxu0 %v515
    %554 = vmatprep.subr.mxu0 0.0
    %555 = vmatpush1.msra.mxu0 %v516
    %556 = vmatprep.subr.mxu0 0.0
    %557 = vmatpush1.msra.mxu0 0.0
    %558 = vmatprep.subr.mxu0 0.0
    %559 = vmatpush1.msra.mxu0 0.0
    %560 = vmatprep.subr.mxu0 0.0
    %561 = vmatpush1.msra.mxu0 0.0
    %562 = vmatprep.subr.mxu0 0.0
    %563 = vmatpush1.msra.mxu0 0.0
    %564 = vmatprep.subr.mxu0 0.0
    %565 = vmatpush1.msra.mxu0 0.0
    %566 = vmatprep.subr.mxu0 0.0
    %567 = vmatpush1.msra.mxu0 0.0
    %568 = vmatprep.subr.mxu0 0.0
    %569 = vmatpush1.msra.mxu0 0.0
    %570 = vmatprep.subr.mxu0 0.0
    %571 = vmatpush1.msra.mxu0 0.0
    %572 = vmatprep.subr.mxu0 0.0
    %573 = vmatpush1.msra.mxu0 0.0
    %574 = vmatprep.subr.mxu0 0.0
    %575 = vmatpush1.msra.mxu0 0.0
    %576 = vmatprep.subr.mxu0 0.0
    %577 = vmatpush1.msra.mxu0 0.0
    %578 = vmatprep.subr.mxu0 0.0
    %579 = vmatpush1.msra.mxu0 0.0
    %580 = vmatprep.subr.mxu0 0.0
    %581 = vmatpush1.msra.mxu0 0.0
    %582 = vmatprep.subr.mxu0 0.0
    %583 = vmatpush1.msra.mxu0 0.0
    %584 = vmatprep.subr.mxu0 0.0
    %585 = vmatpush1.msra.mxu0 0.0
    %586 = vmatprep.subr.mxu0 0.0
    %587 = vmatpush1.msra.mxu0 0.0
    %588 = vmatprep.mubr.f32.mxu0 0.0
    %589 = vmatmul.mubr.f32.gmra.mrb[0].mxu0 %v500
    %v590 = vpop.f32.mrb[0].mxu0
    %v591 = vadd.f32 %v522, %v590
    %v592 = vpop.f32.mrb[0].mxu0
    %593 = vdwg.mxu0
    %594 = vst [vmem:[#allocation14] sm:$0xff] %v591
    // Predicated region
    $region74: #{tpu_custom_call.1} parent=1 // pred_check
      _
    $region75: #{tpu_custom_call.1} parent=1 // pred_check_branch
      %596 = sbr.rel (0) target = $region77
    $region76: #{tpu_custom_call.1} parent=1 // pred_region
      %s598 = ssub.s32 128, 128
      %599 = vsyncadd [#allocation4], %s598
      %s601 = sshll.u32 [#allocation14], 4
      %s602 = int_to_ptr.vmem [resolvable:$true] %s601
      %604 = dma.vmem_to_hbm [thread:$0]  %s602, 128, %s11, [#allocation4]
    $region77: #{tpu_custom_call.1} parent=1 // pred_fallthru
      _
    // Predicated region
    $region78: #{tpu_custom_call.1} parent=1 // pred_check
      _
    $region79: #{tpu_custom_call.1} parent=1 // pred_check_branch
      %606 = sbr.rel (0) target = $region81
    $region80: #{tpu_custom_call.1} parent=1 // pred_region
      %607 = dma.done [#allocation4], 128
    $region81: #{tpu_custom_call.1} parent=1 // pred_fallthru
      _
    %608 = vsyncpa [#allocation3], 1
    %609 = vsyncpa [#allocation6], 1
    %610 = vsyncpa [#allocation9], 1
    %611 = vsyncpa [#allocation12], 1
    %612 = vsyncpa [#allocation4], 1

</llo_original>
